<compile_context>
chip_gen: v5e
topology: v5e:2x2
jax: 0.10.0
libtpu: 0.0.40
codegen_flags: <defaults>
</compile_context>

<pallas_src>
import functools

import jax
import jax.numpy as jnp
from jax import lax
from jax.experimental import pallas as pl
from jax.experimental.pallas import tpu as pltpu


# ----------------------------------------------------------------------------
# Hardware-aware defaults.
# ----------------------------------------------------------------------------
@functools.lru_cache(maxsize=None)
def _vmem_limit_bytes() -> int:
    cap = 64 * 1024 * 1024
    try:
        info = pltpu.get_tpu_info()
        cap = int(getattr(info, "vmem_capacity_bytes", cap))
    except Exception:
        pass
    # ~3/4 of physical VMEM, capped so huge parts don't over-reserve.
    return min(max(cap * 3 // 4, 32 * 1024 * 1024), 100 * 1024 * 1024)


@functools.lru_cache(maxsize=None)
def _compiler_params():
    return pltpu.CompilerParams(
        dimension_semantics=("parallel", "parallel", "arbitrary"),
        vmem_limit_bytes=_vmem_limit_bytes(),
    )


def _default_tm() -> int:
    # Bigger M tiles (fewer weight re-streams) when VMEM headroom allows.
    return 1024 if _vmem_limit_bytes() >= 80 * 1024 * 1024 else 512


def _round_up(x: int, m: int) -> int:
    return ((x + m - 1) // m) * m


def _choose_tile(dim: int, preferred: int, align: int):
    """Return (tile, padded_dim): tile divides padded_dim, tile <= max(preferred, dim<=preferred).

    For dim <= preferred the full dim is used (full-dim blocks are always legal).
    For larger dims we pick the largest `align`-aligned divisor <= preferred; if
    only tiny divisors exist we pad instead of returning an over-sized block.
    """
    if dim <= preferred:
        return dim, dim
    base = max(align, (preferred // align) * align)
    t = base
    floor = max(align, base // 4)
    while t >= floor:
        if dim % t == 0:
            return t, dim
        t -= align
    return base, _round_up(dim, base)


def _largest_divisor_leq(n: int, cap: int) -> int:
    cap = max(1, min(cap, n))
    for d in range(cap, 0, -1):
        if n % d == 0:
            return d
    return 1


# ----------------------------------------------------------------------------
# Linear projection kernel: out = x @ W (+ b).  Grid: (M, N, K) — K last.
# ----------------------------------------------------------------------------
def _linear_kernel(x_ref, w_ref, *rest, has_bias):
    if has_bias:
        b_ref, o_ref, acc_ref = rest
    else:
        o_ref, acc_ref = rest
    k = pl.program_id(2)

    @pl.when(k == 0)
    def _():
        if has_bias:
            # Fold the bias into the accumulator init (no epilogue add).
            acc_ref[...] = jnp.broadcast_to(
                b_ref[...].astype(jnp.float32), acc_ref.shape
            )
        else:
            acc_ref[...] = jnp.zeros_like(acc_ref)

    acc_ref[...] += jnp.dot(
        x_ref[...], w_ref[...], preferred_element_type=jnp.float32
    )

    @pl.when(k == pl.num_programs(2) - 1)
    def _():
        o_ref[...] = acc_ref[...].astype(o_ref.dtype)


def linear(x2d, w, b=None, *, tm=None, tn=512, tk=512):
    """x2d: (M, K), w: (K, N), b: (N,) or None -> (M, N)."""
    M, K = x2d.shape
    Kw, N = w.shape
    assert K == Kw
    if tm is None:
        tm = _default_tm()

    tm, Mp = _choose_tile(M, tm, 8)
    tk, Kp = _choose_tile(K, tk, 128)
    tn, Np = _choose_tile(N, tn, 128)

    if Mp != M or Kp != K:
        x2d = jnp.pad(x2d, ((0, Mp - M), (0, Kp - K)))
    if Kp != K or Np != N:
        w = jnp.pad(w, ((0, Kp - K), (0, Np - N)))

    has_bias = b is not None
    args = [x2d, w]
    in_specs = [
        pl.BlockSpec((tm, tk), lambda i, j, k: (i, k)),  # x
        pl.BlockSpec((tk, tn), lambda i, j, k: (k, j)),  # W
    ]
    if has_bias:
        b2d = b.reshape(1, N).astype(x2d.dtype)
        if Np != N:
            b2d = jnp.pad(b2d, ((0, 0), (0, Np - N)))
        args.append(b2d)
        in_specs.append(pl.BlockSpec((1, tn), lambda i, j, k: (0, j)))

    grid = (Mp // tm, Np // tn, Kp // tk)

    out = pl.pallas_call(
        functools.partial(_linear_kernel, has_bias=has_bias),
        out_shape=jax.ShapeDtypeStruct((Mp, Np), x2d.dtype),
        grid_spec=pltpu.PrefetchScalarGridSpec(
            num_scalar_prefetch=0,
            grid=grid,
            in_specs=in_specs,
            out_specs=pl.BlockSpec((tm, tn), lambda i, j, k: (i, j)),
            scratch_shapes=[pltpu.VMEM((tm, tn), jnp.float32)],
        ),
        compiler_params=_compiler_params(),
    )(*args)

    if Mp != M or Np != N:
        out = out[:M, :N]
    return out


# ----------------------------------------------------------------------------
# Flash-attention core: out = softmax(q @ k^T * scale) @ v
# q: (BH, N, D), k/v: (BH, M, D).  Grid: (head-groups, q tiles, kv tiles).
# Hb heads are processed per grid step; softmax stats/accumulation are f32.
# ----------------------------------------------------------------------------
_MASK_VALUE = -0.7 * float(jnp.finfo(jnp.float32).max)


def _attn_kernel(q_ref, k_ref, v_ref, o_ref, m_sc, l_sc, acc_sc,
                 *, scale, kv_len, tkv, masked):
    kv = pl.program_id(2)

    @pl.when(kv == 0)
    def _():
        m_sc[...] = jnp.full_like(m_sc, -jnp.inf)
        l_sc[...] = jnp.zeros_like(l_sc)
        acc_sc[...] = jnp.zeros_like(acc_sc)

    # Fold the softmax scale into q (tq*D mul instead of tq*tkv per step).
    # Keep the native dtype for the MXU inputs; accumulate in f32.
    q = q_ref[...] * scale
    s = jnp.einsum(
        "hqd,hkd->hqk", q, k_ref[...], preferred_element_type=jnp.float32
    )

    if masked:
        col = kv * tkv + lax.broadcasted_iota(jnp.int32, s.shape, 2)
        s = jnp.where(col < kv_len, s, _MASK_VALUE)

    m_prev = m_sc[...]
    m_new = jnp.maximum(m_prev, s.max(axis=-1, keepdims=True))
    alpha = jnp.exp(m_prev - m_new)
    p = jnp.exp(s - m_new)

    l_sc[...] = alpha * l_sc[...] + p.sum(axis=-1, keepdims=True)
    acc_sc[...] = alpha * acc_sc[...] + jnp.einsum(
        "hqk,hkd->hqd", p.astype(v_ref.dtype), v_ref[...],
        preferred_element_type=jnp.float32,
    )
    m_sc[...] = m_new

    @pl.when(kv == pl.num_programs(2) - 1)
    def _():
        inv_l = pl.reciprocal(l_sc[...], approx=True)
        o_ref[...] = (acc_sc[...] * inv_l).astype(o_ref.dtype)


def flash_attention(q, k, v, *, scale, tq=512, tkv=512):
    BH, N, D = q.shape
    _, M, _ = k.shape

    # Pad sequence lengths to lane/sublane-friendly sizes; padded key columns
    # are masked to -inf inside the kernel, padded query rows are sliced off.
    kv_align = 128 if M >= 128 else 8
    tkv, m_pad = _choose_tile(_round_up(M, kv_align), tkv, kv_align)
    tq, n_pad = _choose_tile(_round_up(N, 8), tq, 8)

    if n_pad != N:
        q = jnp.pad(q, ((0, 0), (0, n_pad - N), (0, 0)))
    if m_pad != M:
        k = jnp.pad(k, ((0, 0), (0, m_pad - M), (0, 0)))
        v = jnp.pad(v, ((0, 0), (0, m_pad - M), (0, 0)))

    # Batch heads per step so each step has ~128 lanes of matmul/store work.
    hb = _largest_divisor_leq(BH, max(1, 128 // D))
    grid = (BH // hb, n_pad // tq, m_pad // tkv)

    kernel = functools.partial(
        _attn_kernel, scale=scale, kv_len=M, tkv=tkv, masked=(m_pad != M)
    )

    out = pl.pallas_call(
        kernel,
        out_shape=jax.ShapeDtypeStruct((BH, n_pad, D), q.dtype),
        grid_spec=pltpu.PrefetchScalarGridSpec(
            num_scalar_prefetch=0,
            grid=grid,
            in_specs=[
                pl.BlockSpec((hb, tq, D), lambda g, i, j: (g, i, 0)),   # q
                pl.BlockSpec((hb, tkv, D), lambda g, i, j: (g, j, 0)),  # k
                pl.BlockSpec((hb, tkv, D), lambda g, i, j: (g, j, 0)),  # v
            ],
            out_specs=pl.BlockSpec((hb, tq, D), lambda g, i, j: (g, i, 0)),
            scratch_shapes=[
                pltpu.VMEM((hb, tq, 1), jnp.float32),   # running max
                pltpu.VMEM((hb, tq, 1), jnp.float32),   # running denom
                pltpu.VMEM((hb, tq, D), jnp.float32),   # output accumulator
            ],
        ),
        compiler_params=_compiler_params(),
    )(q, k, v)

    if n_pad != N:
        out = out[:, :N, :]
    return out


# ----------------------------------------------------------------------------
# Full CrossAttention forward.
# ----------------------------------------------------------------------------
def cross_attention(x, context, wq, wk, wv, wo, bo, *, heads, dim_head):
    """
    x:       (b, n, query_dim)
    context: (b, m, context_dim) or None (self-attention)
    wq: (query_dim, inner)   wk, wv: (context_dim, inner)
    wo: (inner, query_dim)   bo: (query_dim,)
    """
    b, n, query_dim = x.shape
    inner = heads * dim_head
    scale = dim_head ** (-0.5)
    self_attn = context is None
    context = x if context is None else context
    m = context.shape[1]
    ctx_dim = context.shape[-1]

    x2d = x.reshape(b * n, query_dim)

    if self_attn and wq.shape[0] == wk.shape[0]:
        # Fused QKV projection: x is streamed from HBM once, single launch.
        w_qkv = jnp.concatenate([wq, wk, wv], axis=1)            # (qdim, 3*inner)
        qkv = linear(x2d, w_qkv)                                 # (b*n, 3*inner)
        qkv = qkv.reshape(b, n, 3, heads, dim_head).transpose(2, 0, 3, 1, 4)
        q = qkv[0].reshape(b * heads, n, dim_head)
        k = qkv[1].reshape(b * heads, n, dim_head)
        v = qkv[2].reshape(b * heads, n, dim_head)
    else:
        # Fused KV projection: context is streamed from HBM once.
        ctx2d = context.reshape(b * m, ctx_dim)
        w_kv = jnp.concatenate([wk, wv], axis=1)                 # (cdim, 2*inner)
        q = linear(x2d, wq)                                      # (b*n, inner)
        kv = linear(ctx2d, w_kv)                                 # (b*m, 2*inner)
        q = q.reshape(b, n, heads, dim_head).transpose(0, 2, 1, 3).reshape(
            b * heads, n, dim_head)
        kv = kv.reshape(b, m, 2, heads, dim_head).transpose(2, 0, 3, 1, 4)
        k = kv[0].reshape(b * heads, m, dim_head)
        v = kv[1].reshape(b * heads, m, dim_head)

    # TODO(synk): optional boolean `mask` (masked_fill with -finfo.max) is not
    # wired into the attention kernel; the module default (mask=None) is covered.
    out = flash_attention(q, k, v, scale=scale)                  # (b*h, n, d)

    # '(b h) n d -> b n (h d)'
    out = out.reshape(b, heads, n, dim_head).transpose(0, 2, 1, 3).reshape(
        b * n, inner)

    # to_out[0]: Linear(inner, query_dim) with bias.  Dropout(p=0.0) is identity.
    out = linear(out, wo, bo)
    return out.reshape(b, n, query_dim)


# ----------------------------------------------------------------------------
# Pure-JAX reference (mirrors the PyTorch module with fp32 attention math).
# ----------------------------------------------------------------------------
def cross_attention_ref(x, context, wq, wk, wv, wo, bo, *, heads, dim_head):
    context = x if context is None else context
    b, n, _ = x.shape
    m = context.shape[1]
    scale = dim_head ** (-0.5)

    q = (x @ wq).reshape(b, n, heads, dim_head).transpose(0, 2, 1, 3)
    k = (context @ wk).reshape(b, m, heads, dim_head).transpose(0, 2, 1, 3)
    v = (context @ wv).reshape(b, m, heads, dim_head).transpose(0, 2, 1, 3)

    sim = jnp.einsum(
        "bhid,bhjd->bhij", q.astype(jnp.float32), k.astype(jnp.float32)
    ) * scale
    attn = jax.nn.softmax(sim, axis=-1)
    out = jnp.einsum("bhij,bhjd->bhid", attn, v.astype(jnp.float32))
    out = out.transpose(0, 2, 1, 3).reshape(b, n, heads * dim_head)
    return (out.astype(x.dtype) @ wo) + bo


if __name__ == "__main__":
    batch, seq_q, seq_kv = 2, 8, 16
    query_dim, context_dim = 32, 32
    heads, dim_head = 2, 16
    inner = heads * dim_head

    key = jax.random.PRNGKey(0)
    kx, kc, kq, kk, kv_, ko, kb = jax.random.split(key, 7)

    x = jax.random.normal(kx, (batch, seq_q, query_dim), dtype=jnp.float32)
    context = jax.random.normal(kc, (batch, seq_kv, context_dim), dtype=jnp.float32)

    def _init(k, fan_in, shape):
        bound = 1.0 / (fan_in ** 0.5)
        return jax.random.uniform(k, shape, jnp.float32, -bound, bound)

    # Weights stored as (in, out) = transposed PyTorch Linear weights.
    wq = _init(kq, query_dim, (query_dim, inner))
    wk = _init(kk, context_dim, (context_dim, inner))
    wv = _init(kv_, context_dim, (context_dim, inner))
    wo = _init(ko, inner, (inner, query_dim))
    bo = _init(kb, inner, (query_dim,))

    out = cross_attention(
        x, context, wq, wk, wv, wo, bo, heads=heads, dim_head=dim_head
    )
    out = jax.block_until_ready(out)

    ref = cross_attention_ref(
        x, context, wq, wk, wv, wo, bo, heads=heads, dim_head=dim_head
    )
    assert out.shape == (batch, seq_q, query_dim), out.shape
    # Tolerance accounts for the EUP approximate-reciprocal softmax finalize.
    assert jnp.allclose(out, ref, atol=2e-3, rtol=2e-3), "mismatch vs reference"

    # Also exercise the self-attention (fused QKV) path (context=None).
    out_self = jax.block_until_ready(
        cross_attention(x, None, wq, wk, wv, wo, bo, heads=heads, dim_head=dim_head)
    )
    ref_self = cross_attention_ref(
        x, None, wq, wk, wv, wo, bo, heads=heads, dim_head=dim_head
    )
    assert jnp.allclose(out_self, ref_self, atol=2e-3, rtol=2e-3), "self-attn mismatch"

    print("KERNEL_OK")
</pallas_src>

<mosaic_0001>
module attributes {stable_mosaic.version = 11 : i64} {
  func.func @_linear_kernel(%arg0: i32, %arg1: i32, %arg2: i32, %arg3: memref<16x32xf32, #tpu.memory_space<vmem>>, %arg4: memref<32x32xf32, #tpu.memory_space<vmem>>, %arg5: memref<16x32xf32, #tpu.memory_space<vmem>>, %arg6: memref<16x32xf32, #tpu.memory_space<vmem>>) attributes {dimension_semantics = [#tpu.dimension_semantics<parallel>, #tpu.dimension_semantics<parallel>, #tpu.dimension_semantics<arbitrary>], iteration_bounds = array<i64: 1, 1, 1>, scalar_prefetch = 0 : i64, scratch_operands = 1 : i64, tpu.core_type = #tpu.core_type<tc>, window_params = [{transform_indices = @transform_0, window_bounds = array<i64: 16, 32>}, {transform_indices = @transform_1, window_bounds = array<i64: 32, 32>}, {transform_indices = @transform_2, window_bounds = array<i64: 16, 32>}]} {
    %c0_i32 = arith.constant 0 : i32
    %0 = arith.cmpi eq, %arg2, %c0_i32 : i32
    %1 = arith.extui %0 : i1 to i32
    %c0_i32_0 = arith.constant 0 : i32
    %2 = arith.cmpi ne, %1, %c0_i32_0 : i32
    scf.if %2 {
      %cst_10 = arith.constant 0.000000e+00 : f32
      %12 = vector.broadcast %cst_10 : f32 to vector<16x32xf32>
      %c0_11 = arith.constant 0 : index
      %c0_12 = arith.constant 0 : index
      %13 = vector.load %arg6[%c0_11, %c0_12] : memref<16x32xf32, #tpu.memory_space<vmem>>, vector<16x32xf32>
      tpu.vector_store %arg6[%c0_11, %c0_12], %12 {strides = array<i32>} : memref<16x32xf32, #tpu.memory_space<vmem>>, vector<16x32xf32>,
    } else {
    }
    %c0 = arith.constant 0 : index
    %c0_1 = arith.constant 0 : index
    %3 = vector.load %arg6[%c0, %c0_1] : memref<16x32xf32, #tpu.memory_space<vmem>>, vector<16x32xf32>
    %c0_2 = arith.constant 0 : index
    %c0_3 = arith.constant 0 : index
    %4 = vector.load %arg3[%c0_2, %c0_3] : memref<16x32xf32, #tpu.memory_space<vmem>>, vector<16x32xf32>
    %c0_4 = arith.constant 0 : index
    %c0_5 = arith.constant 0 : index
    %5 = vector.load %arg4[%c0_4, %c0_5] : memref<32x32xf32, #tpu.memory_space<vmem>>, vector<32x32xf32>
    %cst = arith.constant dense<0.000000e+00> : vector<16x32xf32>
    %6 = tpu.matmul %4, %5, %cst {dimension_numbers = #tpu.dot_dimension_numbers<[1], [0], [0], [1], [0, 0, 1, 1], [], []>} : vector<16x32xf32>, vector<32x32xf32>, vector<16x32xf32> -> vector<16x32xf32>
    %7 = arith.addf %3, %6 : vector<16x32xf32>
    %c0_6 = arith.constant 0 : index
    %c0_7 = arith.constant 0 : index
    %8 = vector.load %arg6[%c0_6, %c0_7] : memref<16x32xf32, #tpu.memory_space<vmem>>, vector<16x32xf32>
    tpu.vector_store %arg6[%c0_6, %c0_7], %7 {strides = array<i32>} : memref<16x32xf32, #tpu.memory_space<vmem>>, vector<16x32xf32>,
    %c0_i32_8 = arith.constant 0 : i32
    %9 = arith.cmpi eq, %arg2, %c0_i32_8 : i32
    %10 = arith.extui %9 : i1 to i32
    %c0_i32_9 = arith.constant 0 : i32
    %11 = arith.cmpi ne, %10, %c0_i32_9 : i32
    scf.if %11 {
      %c0_10 = arith.constant 0 : index
      %c0_11 = arith.constant 0 : index
      %12 = vector.load %arg6[%c0_10, %c0_11] : memref<16x32xf32, #tpu.memory_space<vmem>>, vector<16x32xf32>
      %c0_12 = arith.constant 0 : index
      %c0_13 = arith.constant 0 : index
      %13 = vector.load %arg5[%c0_12, %c0_13] : memref<16x32xf32, #tpu.memory_space<vmem>>, vector<16x32xf32>
      tpu.vector_store %arg5[%c0_12, %c0_13], %12 {strides = array<i32>} : memref<16x32xf32, #tpu.memory_space<vmem>>, vector<16x32xf32>,
    } else {
    }
    return
  }
  func.func @transform_0(%arg0: i32, %arg1: i32, %arg2: i32) -> (i32, i32) {
    %c0_i32 = arith.constant 0 : i32
    return %arg0, %arg2 : i32, i32
  }
  func.func @transform_1(%arg0: i32, %arg1: i32, %arg2: i32) -> (i32, i32) {
    %c0_i32 = arith.constant 0 : i32
    return %arg2, %arg1 : i32, i32
  }
  func.func @transform_2(%arg0: i32, %arg1: i32, %arg2: i32) -> (i32, i32) {
    %c0_i32 = arith.constant 0 : i32
    return %arg0, %arg1 : i32, i32
  }
}

</mosaic_0001>

<llo_original>
// kernel: tpu_custom_call.1
$region0: #{tpu_custom_call.1}
  #allocation0 [shape = 'u32[]', space=smem, size = 0x4, offset = 0x4, fixed_abs, tag = 'smem constant byte address 0x4 - core index']
  #allocation1 [shape = 'u32[72,128]{1,0:T(1,128)}', space=vmem, size = 0x9000, scoped, tag = 'internal scratch']
  #allocation2 [shape = 'f32[16,32]{1,0:T(8,128)}', space=vmem, size = 0x2000, scoped, tag = 'scratch operand']
  %s0 = inlined_call_operand.hbm [shape: f32[16,32], index: 0, kind: input, shape index: {}]
  %s1 = inlined_call_operand.hbm [shape: f32[32,32], index: 1, kind: input, shape index: {}]
  %s2 = inlined_call_operand.hbm [shape: f32[16,32], index: 2, kind: output, shape index: {}]
  %s3 = sld [smem:[#allocation0]]
  $region34: #{tpu_custom_call.1} parent=0
    _
  %s5 = ssub.s32 1, %s3
  %s6 = scalar_select 0, %s5, %s3
  $region1: #{tpu_custom_call.1} parent=0
    #allocation3 [shape = 'u8[8192]{0}', space=vmem, size = 0x2000, scoped, tag = 'input window, operand 0, single buffered']
    #allocation4 [shape = 's32[1]{0}', space=sflag, size = 0x4, scoped, tag = 'scoped memory for tpu_custom_call.1']
    #allocation5 [shape = 's32[1]{0}', space=sflag, size = 0x4, scoped, tag = 'scoped memory for tpu_custom_call.1']
    #allocation6 [shape = 'u8[16384]{0}', space=vmem, size = 0x4000, scoped, tag = 'input window, operand 1, single buffered']
    #allocation7 [shape = 's32[1]{0}', space=sflag, size = 0x4, scoped, tag = 'scoped memory for tpu_custom_call.1']
    #allocation8 [shape = 'u8[8192]{0}', space=vmem, size = 0x2000, scoped, tag = 'output window, operand 0, single buffered']
    %7 = vsyncpa [#allocation4], 0
    %8 = vsyncpa [#allocation7], 0
    %9 = vsyncpa [#allocation5], 0
    // Predicated region
    $region2: #{tpu_custom_call.1} parent=1 // pred_check
      _
    $region3: #{tpu_custom_call.1} parent=1 // pred_check_branch
      %11 = sbr.rel (0) target = $region5
    $region4: #{tpu_custom_call.1} parent=1 // pred_region
      %13 = vsyncadd [#allocation4], 0
      %s14 = sshll.u32 %s0, 4
      %s15 = int_to_ptr.hbm [resolvable:$true] %s14
      %s16 = sshll.u32 [#allocation3], 4
      %s17 = int_to_ptr.vmem [resolvable:$true] %s16
      %22 = dma.hbm_to_vmem [thread:$0]  %s15, 256, %s17, [#allocation4], 128, 128, 8
    $region5: #{tpu_custom_call.1} parent=1 // pred_fallthru
      _
    // Predicated region
    $region6: #{tpu_custom_call.1} parent=1 // pred_check
      _
    $region7: #{tpu_custom_call.1} parent=1 // pred_check_branch
      %24 = sbr.rel (0) target = $region9
    $region8: #{tpu_custom_call.1} parent=1 // pred_region
      %26 = vsyncadd [#allocation7], 0
      %s27 = sshll.u32 %s1, 4
      %s28 = int_to_ptr.hbm [resolvable:$true] %s27
      %s29 = sshll.u32 [#allocation6], 4
      %s30 = int_to_ptr.vmem [resolvable:$true] %s29
      %35 = dma.hbm_to_vmem [thread:$0]  %s28, 512, %s30, [#allocation7], 128, 128, 8
    $region9: #{tpu_custom_call.1} parent=1 // pred_fallthru
      _
    // Predicated region
    $region10: #{tpu_custom_call.1} parent=1 // pred_check
      _
    $region11: #{tpu_custom_call.1} parent=1 // pred_check_branch
      %37 = sbr.rel (0) target = $region13
    $region12: #{tpu_custom_call.1} parent=1 // pred_region
      %39 = dma.done [#allocation4], 256
    $region13: #{tpu_custom_call.1} parent=1 // pred_fallthru
      _
    // Predicated region
    $region14: #{tpu_custom_call.1} parent=1 // pred_check
      _
    $region15: #{tpu_custom_call.1} parent=1 // pred_check_branch
      %41 = sbr.rel (0) target = $region17
    $region16: #{tpu_custom_call.1} parent=1 // pred_region
      %43 = dma.done [#allocation7], 512
    $region17: #{tpu_custom_call.1} parent=1 // pred_fallthru
      _
    %p44 = scmp.eq.s32.totalorder 0, 0
    // Predicated region
    $region18: #{tpu_custom_call.1} parent=1 // pred_check
      %p45 = pneg %p44
    $region19: #{tpu_custom_call.1} parent=1 // pred_check_branch
      %47 = sbr.rel (%p45) target = $region21
    $region20: #{tpu_custom_call.1} parent=1 // pred_region
      %vm48 = vcmask 261120
      %49 = vst.msk [vmem:[#allocation2] sm:$0xff] %vm48, 0.0
      %50 = vst.msk [vmem:[#allocation2 + $0x8] sm:$0xff] %vm48, 0.0
    $region21: #{tpu_custom_call.1} parent=1 // pred_fallthru
      _
    %v51 = vld [vmem:[#allocation2] sm:$0xff]
    %v52 = vld [vmem:[#allocation2 + $0x8] sm:$0xff]
    %v53 = vld [vmem:[#allocation3] sm:$0xff]
    %v54 = vld [vmem:[#allocation3 + $0x8] sm:$0xff]
    %v55 = vld [vmem:[#allocation6] sm:$0xff]
    %v56 = vld [vmem:[#allocation6 + $0x8] sm:$0xff]
    %v57 = vld [vmem:[#allocation6 + $0x10] sm:$0xff]
    %v58 = vld [vmem:[#allocation6 + $0x18] sm:$0xff]
    %vm59 = vcmask 261120
    %v61 = vsel %vm59, %v53, 0
    %v64 = vsel %vm59, %v54, 0
    %66 = vmatpush.msra.mxu0 0.0
    %67 = vmatpush.msra.mxu0 0.0
    %68 = vmatpush.msra.mxu0 0.0
    %69 = vmatpush.msra.mxu0 0.0
    %70 = vmatpush.msra.mxu0 0.0
    %71 = vmatpush.msra.mxu0 0.0
    %72 = vmatpush.msra.mxu0 0.0
    %73 = vmatpush.msra.mxu0 0.0
    %74 = vmatpush.msra.mxu0 0.0
    %75 = vmatpush.msra.mxu0 0.0
    %76 = vmatpush.msra.mxu0 0.0
    %77 = vmatpush.msra.mxu0 0.0
    %78 = vmatpush.msra.mxu0 %v58
    %79 = vmatpush.msra.mxu0 %v57
    %80 = vmatpush.msra.mxu0 %v56
    %81 = vmatpush.msra.mxu0 %v55
    %82 = vmatmul.f32.gmra.mxu0 %v61
    %v83 = vpop.f32.mrf.mxu0
    %v84 = vadd.f32 0.0, %v83
    %85 = vmatmul.f32.gmra.mxu0 %v64
    %v86 = vpop.f32.mrf.mxu0
    %v87 = vadd.f32 0.0, %v86
    %88 = vdwg.mxu0
    %v89 = vadd.f32 %v51, %v84
    %v90 = vadd.f32 %v52, %v87
    %91 = vst.msk [vmem:[#allocation2] sm:$0xff] %vm59, %v89
    %92 = vst.msk [vmem:[#allocation2 + $0x8] sm:$0xff] %vm59, %v90
    // Predicated region
    $region22: #{tpu_custom_call.1} parent=1 // pred_check
      %p93 = pneg %p44
    $region23: #{tpu_custom_call.1} parent=1 // pred_check_branch
      %95 = sbr.rel (%p93) target = $region25
    $region24: #{tpu_custom_call.1} parent=1 // pred_region
      %v96 = vld [vmem:[#allocation2] sm:$0xff]
      %v97 = vld [vmem:[#allocation2 + $0x8] sm:$0xff]
      %98 = vst.msk [vmem:[#allocation8] sm:$0xff] %vm59, %v96
      %99 = vst.msk [vmem:[#allocation8 + $0x8] sm:$0xff] %vm59, %v97
    $region25: #{tpu_custom_call.1} parent=1 // pred_fallthru
      _
    // Predicated region
    $region26: #{tpu_custom_call.1} parent=1 // pred_check
      _
    $region27: #{tpu_custom_call.1} parent=1 // pred_check_branch
      %101 = sbr.rel (0) target = $region29
    $region28: #{tpu_custom_call.1} parent=1 // pred_region
      %103 = vsyncadd [#allocation5], 0
      %s104 = sshll.u32 [#allocation8], 4
      %s105 = int_to_ptr.vmem [resolvable:$true] %s104
      %s106 = sshll.u32 %s2, 4
      %s107 = int_to_ptr.hbm [resolvable:$true] %s106
      %112 = dma.vmem_to_hbm [thread:$0]  %s105, 256, %s107, [#allocation5], 128, 128, 8
    $region29: #{tpu_custom_call.1} parent=1 // pred_fallthru
      _
    // Predicated region
    $region30: #{tpu_custom_call.1} parent=1 // pred_check
      _
    $region31: #{tpu_custom_call.1} parent=1 // pred_check_branch
      %114 = sbr.rel (0) target = $region33
    $region32: #{tpu_custom_call.1} parent=1 // pred_region
      %116 = dma.done [#allocation5], 256
    $region33: #{tpu_custom_call.1} parent=1 // pred_fallthru
      _
    %117 = vsyncpa [#allocation4], 1
    %118 = vsyncpa [#allocation7], 1
    %119 = vsyncpa [#allocation5], 1

</llo_original>
